<compile_context>
chip_gen: v5e
topology: v5e:2x2
jax: 0.10.0
libtpu: 0.0.40
codegen_flags: <defaults>
</compile_context>

<pallas_src>
from functools import partial

import jax
import jax.numpy as jnp
from jax.experimental import pallas as pl
from jax.experimental.pallas import tpu as pltpu


# ----------------------------------------------------------------------------
# Kernels
# ----------------------------------------------------------------------------
def adain_rows_kernel(x_ref, gb_ref, out_ref, *, eps):
    """Spatial-on-lanes AdaIN: one row = one (sample, channel)."""
    # x_ref:  (BR, HW)  row block of the flattened (N*C, H*W) input
    # gb_ref: (BR, 2)   fused [gamma, beta] columns, float32
    # out_ref:(BR, HW)
    x = x_ref[...].astype(jnp.float32)                        # single upcast
    inv_hw = jnp.float32(1.0 / x.shape[-1])

    # Single-pass statistics along the lane (spatial) axis.
    s1 = jnp.sum(x, axis=-1, keepdims=True)                   # (BR, 1)
    s2 = jnp.sum(x * x, axis=-1, keepdims=True)               # (BR, 1)
    mean = s1 * inv_hw
    var = jnp.maximum(s2 * inv_hw - mean * mean, 0.0)         # clamp: no rsqrt NaN

    rstd = jax.lax.rsqrt(var + eps)                           # EUP slot
    gb = gb_ref[...]
    scale = gb[:, 0:1] * rstd
    shift = gb[:, 1:2] - mean * scale

    out_ref[...] = (x * scale + shift).astype(out_ref.dtype)  # fused FMA pass


def adain_chlast_kernel(x_ref, gb_ref, out_ref, *, eps):
    """Channels-on-lanes AdaIN for small feature maps (HW < 128)."""
    # x_ref:  (1, HW, TC), gb_ref: (1, 2, TC), out_ref: (1, HW, TC)
    x = x_ref[...].astype(jnp.float32)
    inv_hw = jnp.float32(1.0 / x.shape[1])

    s1 = jnp.sum(x, axis=1, keepdims=True)                    # (1, 1, TC)
    s2 = jnp.sum(x * x, axis=1, keepdims=True)
    mean = s1 * inv_hw
    var = jnp.maximum(s2 * inv_hw - mean * mean, 0.0)

    rstd = jax.lax.rsqrt(var + eps)
    gb = gb_ref[...]
    scale = gb[:, 0:1, :] * rstd
    shift = gb[:, 1:2, :] - mean * scale

    out_ref[...] = (x * scale + shift).astype(out_ref.dtype)


# ----------------------------------------------------------------------------
# Generation-aware tiling policy
# ----------------------------------------------------------------------------
_GEN_POLICY = {
    # target block payload, explicit vmem limit (None -> leave compiler default),
    # assumed TensorCores per chip (for minimum grid-step count).
    "v5e": dict(target_bytes=2 << 20, vmem_limit=32 << 20, num_cores=1),
    "v6e": dict(target_bytes=4 << 20, vmem_limit=64 << 20, num_cores=1),
    "v7x": dict(target_bytes=4 << 20, vmem_limit=48 << 20, num_cores=2),
    "unknown": dict(target_bytes=2 << 20, vmem_limit=None, num_cores=1),
}


def _tpu_generation():
    try:
        kind = (getattr(jax.devices()[0], "device_kind", "") or "").lower()
    except Exception:
        return "unknown"
    if "v5e" in kind or "v5 lite" in kind or "v5lite" in kind:
        return "v5e"
    if "v6" in kind:
        return "v6e"
    if "v7" in kind or "tpu7" in kind:
        return "v7x"
    return "unknown"


def _choose_block_rows(R, HW, itemsize, *, native_rows, target_bytes, min_steps):
    """Largest native-multiple row block under the byte target, capped so the
    grid has at least `min_steps` steps (when R permits).  Not required to
    divide R — the grid uses cdiv and the last block may be ragged."""
    if R <= native_rows:
        return R  # full-extent block is always layout-legal
    bytes_per_row = max(1, HW * itemsize)
    rows_by_bytes = max(native_rows,
                        (target_bytes // bytes_per_row) // native_rows * native_rows)
    rows_by_steps = max(native_rows,
                        (R // min_steps) // native_rows * native_rows)
    return max(native_rows, min(rows_by_bytes, rows_by_steps))


def _choose_block_cols(C, HW, N, itemsize, *, target_bytes, min_steps):
    """Channel-block width for the channels-last path (lane axis = C)."""
    if C % 128 != 0 or C <= 128:
        return C  # full-extent lane dim (always layout-legal)
    bytes_per_col = max(1, HW * itemsize)
    cols_by_bytes = max(128, (target_bytes // bytes_per_col) // 128 * 128)
    need_col_blocks = max(1, -(-min_steps // N))  # ceil(min_steps / N)
    cols_by_steps = max(128, (C // need_col_blocks) // 128 * 128)
    return min(C, cols_by_bytes, cols_by_steps)


# ----------------------------------------------------------------------------
# Wrapper
# ----------------------------------------------------------------------------
def adaptive_instance_norm(x, style, weight, bias, *, eps=1e-5):
    """x: (N, C, H, W), style: (N, S), weight: (2C, S), bias: (2C,)."""
    N, C, H, W = x.shape
    HW = H * W
    itemsize = x.dtype.itemsize

    # Style projection hoisted out of the kernel: one batched XLA GEMM.
    s = (style @ weight.T + bias).astype(jnp.float32)         # (N, 2C)
    gamma = s[:, :C]                                          # (N, C)
    beta = s[:, C:]                                           # (N, C)

    pol = _GEN_POLICY[_tpu_generation()]
    min_steps = max(2, 2 * pol["num_cores"])
    native_rows = {4: 8, 2: 16, 1: 32}.get(itemsize, 8)
    vmem_kw = {}
    if pol["vmem_limit"] is not None:
        vmem_kw["vmem_limit_bytes"] = pol["vmem_limit"]

    if HW >= 128:
        # --- Spatial-on-lanes path: flatten to (N*C, HW), lane-dense stores.
        R = N * C
        x2 = x.reshape(R, HW)
        gb = jnp.stack([gamma.reshape(R), beta.reshape(R)], axis=-1)  # (R, 2)

        block_rows = _choose_block_rows(
            R, HW, itemsize, native_rows=native_rows,
            target_bytes=pol["target_bytes"], min_steps=min_steps)
        grid = (pl.cdiv(R, block_rows),)

        out = pl.pallas_call(
            partial(adain_rows_kernel, eps=eps),
            out_shape=jax.ShapeDtypeStruct((R, HW), x.dtype),
            grid=grid,
            in_specs=[
                pl.BlockSpec((block_rows, HW), lambda r: (r, 0)),
                pl.BlockSpec((block_rows, 2), lambda r: (r, 0)),
            ],
            out_specs=pl.BlockSpec((block_rows, HW), lambda r: (r, 0)),
            compiler_params=pltpu.CompilerParams(
                dimension_semantics=("parallel",), **vmem_kw),
            cost_estimate=pl.CostEstimate(
                flops=6 * R * HW,
                transcendentals=R,
                bytes_accessed=2 * R * HW * itemsize + 2 * R * 4),
        )(x2, gb)
        return out.reshape(N, C, H, W)

    # --- Channels-on-lanes path for small feature maps (HW < 128): makes the
    # lane axis C, avoiding masked partial stores on lane-sparse slabs.
    xc = x.reshape(N, C, HW).transpose(0, 2, 1)               # (N, HW, C)
    gb = jnp.stack([gamma, beta], axis=1)                     # (N, 2, C)

    block_cols = _choose_block_cols(
        C, HW, N, itemsize,
        target_bytes=pol["target_bytes"], min_steps=min_steps)
    grid = (N, pl.cdiv(C, block_cols))

    out = pl.pallas_call(
        partial(adain_chlast_kernel, eps=eps),
        out_shape=jax.ShapeDtypeStruct((N, HW, C), x.dtype),
        grid=grid,
        in_specs=[
            pl.BlockSpec((1, HW, block_cols), lambda n, c: (n, 0, c)),
            pl.BlockSpec((1, 2, block_cols), lambda n, c: (n, 0, c)),
        ],
        out_specs=pl.BlockSpec((1, HW, block_cols), lambda n, c: (n, 0, c)),
        compiler_params=pltpu.CompilerParams(
            dimension_semantics=("parallel", "parallel"), **vmem_kw),
        cost_estimate=pl.CostEstimate(
            flops=6 * N * C * HW,
            transcendentals=N * C,
            bytes_accessed=2 * N * C * HW * itemsize + 2 * N * C * 4),
    )(xc, gb)
    return out.transpose(0, 2, 1).reshape(N, C, H, W)


# ----------------------------------------------------------------------------
# Pure-JAX reference (two-pass, matches the PyTorch module semantics)
# ----------------------------------------------------------------------------
def adain_reference(x, style, weight, bias, eps=1e-5):
    C = x.shape[1]
    s = style @ weight.T + bias                                # (N, 2C)
    gamma = s[:, :C][:, :, None, None]                         # (N, C, 1, 1)
    beta = s[:, C:][:, :, None, None]                          # (N, C, 1, 1)
    mean = x.mean(axis=(2, 3), keepdims=True)
    var = ((x - mean) ** 2).mean(axis=(2, 3), keepdims=True)   # biased
    xhat = (x - mean) / jnp.sqrt(var + eps)
    return gamma * xhat + beta


if __name__ == "__main__":
    key = jax.random.PRNGKey(0)

    def make_case(case_key, N, C, H, W, style_dim, dtype):
        kx, ks, kw = jax.random.split(case_key, 3)
        x = jax.random.normal(kx, (N, C, H, W), dtype=jnp.float32).astype(dtype)
        style = jax.random.normal(ks, (N, style_dim), dtype=jnp.float32)
        # nn.Linear(style_dim, 2*C) default init, bias overridden to
        # [ones (gamma half), zeros (beta half)].
        bound = 1.0 / (style_dim ** 0.5)
        weight = jax.random.uniform(
            kw, (2 * C, style_dim), minval=-bound, maxval=bound, dtype=jnp.float32)
        bias = jnp.concatenate(
            [jnp.ones((C,), jnp.float32), jnp.zeros((C,), jnp.float32)])
        return x, style, weight, bias

    cases = [
        # Primary case (spatial-on-lanes path, HW = 256 >= 128).
        ((2, 4, 16, 16), 32, jnp.float32, 1e-4),
        # bf16 + ragged row count: exercises cdiv grid / partial last block.
        ((3, 20, 16, 16), 32, jnp.bfloat16, 5e-2),
        # Small feature map: exercises the channels-on-lanes path (HW = 32).
        ((2, 8, 4, 8), 32, jnp.float32, 1e-4),
    ]

    for shape, style_dim, dtype, tol in cases:
        key, sub = jax.random.split(key)
        x, style, weight, bias = make_case(sub, *shape, style_dim, dtype)
        out = jax.block_until_ready(
            adaptive_instance_norm(x, style, weight, bias))
        ref = adain_reference(x.astype(jnp.float32), style, weight, bias)
        assert out.shape == shape
        assert jnp.allclose(out.astype(jnp.float32), ref, atol=tol, rtol=tol), (
            f"mismatch vs reference for shape={shape} dtype={dtype}")

    print("KERNEL_OK")
</pallas_src>

<mosaic_0001>
module attributes {stable_mosaic.version = 11 : i64} {
  func.func @adain_rows_kernel(%arg0: i32, %arg1: memref<8x256xf32, #tpu.memory_space<vmem>>, %arg2: memref<8x2xf32, #tpu.memory_space<vmem>>, %arg3: memref<8x256xf32, #tpu.memory_space<vmem>>) attributes {dimension_semantics = [#tpu.dimension_semantics<parallel>], iteration_bounds = array<i64: 1>, scalar_prefetch = 0 : i64, scratch_operands = 0 : i64, tpu.core_type = #tpu.core_type<tc>, window_params = [{transform_indices = @transform_0, window_bounds = array<i64: 8, 256>}, {transform_indices = @transform_1, window_bounds = array<i64: 8, 2>}, {transform_indices = @transform_2, window_bounds = array<i64: 8, 256>}]} {
    %c0 = arith.constant 0 : index
    %c0_0 = arith.constant 0 : index
    %0 = vector.load %arg1[%c0, %c0_0] : memref<8x256xf32, #tpu.memory_space<vmem>>, vector<8x256xf32>
    %cst = arith.constant dense<0.000000e+00> : vector<8xf32>
    %1 = vector.multi_reduction <add>, %0, %cst [1] : vector<8x256xf32> to vector<8xf32>
    %2 = vector.shape_cast %1 : vector<8xf32> to vector<8x1xf32>
    %3 = arith.mulf %0, %0 : vector<8x256xf32>
    %cst_1 = arith.constant dense<0.000000e+00> : vector<8xf32>
    %4 = vector.multi_reduction <add>, %3, %cst_1 [1] : vector<8x256xf32> to vector<8xf32>
    %5 = vector.shape_cast %4 : vector<8xf32> to vector<8x1xf32>
    %cst_2 = arith.constant 3.906250e-03 : f32
    %6 = vector.broadcast %cst_2 : f32 to vector<8x1xf32>
    %7 = arith.mulf %2, %6 : vector<8x1xf32>
    %cst_3 = arith.constant 3.906250e-03 : f32
    %8 = vector.broadcast %cst_3 : f32 to vector<8x1xf32>
    %9 = arith.mulf %5, %8 : vector<8x1xf32>
    %10 = arith.mulf %7, %7 : vector<8x1xf32>
    %11 = arith.subf %9, %10 : vector<8x1xf32>
    %cst_4 = arith.constant 0.000000e+00 : f32
    %12 = vector.broadcast %cst_4 : f32 to vector<8x1xf32>
    %13 = arith.maximumf %11, %12 : vector<8x1xf32>
    %cst_5 = arith.constant 9.99999974E-6 : f32
    %14 = vector.broadcast %cst_5 : f32 to vector<8x1xf32>
    %15 = arith.addf %13, %14 : vector<8x1xf32>
    %16 = math.rsqrt %15 : vector<8x1xf32>
    %c0_6 = arith.constant 0 : index
    %c0_7 = arith.constant 0 : index
    %17 = vector.load %arg2[%c0_6, %c0_7] : memref<8x2xf32, #tpu.memory_space<vmem>>, vector<8x2xf32>
    %18 = vector.extract_strided_slice %17 {offsets = [0, 0], sizes = [8, 1], strides = [1, 1]} : vector<8x2xf32> to vector<8x1xf32>
    %19 = arith.mulf %18, %16 : vector<8x1xf32>
    %20 = vector.extract_strided_slice %17 {offsets = [0, 1], sizes = [8, 1], strides = [1, 1]} : vector<8x2xf32> to vector<8x1xf32>
    %21 = arith.mulf %7, %19 : vector<8x1xf32>
    %22 = arith.subf %20, %21 : vector<8x1xf32>
    %23 = vector.broadcast %19 : vector<8x1xf32> to vector<8x256xf32>
    %24 = arith.mulf %0, %23 : vector<8x256xf32>
    %25 = vector.broadcast %22 : vector<8x1xf32> to vector<8x256xf32>
    %26 = arith.addf %24, %25 : vector<8x256xf32>
    %c0_8 = arith.constant 0 : index
    %c0_9 = arith.constant 0 : index
    %27 = vector.load %arg3[%c0_8, %c0_9] : memref<8x256xf32, #tpu.memory_space<vmem>>, vector<8x256xf32>
    tpu.vector_store %arg3[%c0_8, %c0_9], %26 {strides = array<i32>} : memref<8x256xf32, #tpu.memory_space<vmem>>, vector<8x256xf32>,
    return
  }
  func.func @transform_0(%arg0: i32) -> (i32, i32) {
    %c0_i32 = arith.constant 0 : i32
    %c0_i32_0 = arith.constant 0 : i32
    return %arg0, %c0_i32 : i32, i32
  }
  func.func @transform_1(%arg0: i32) -> (i32, i32) {
    %c0_i32 = arith.constant 0 : i32
    %c0_i32_0 = arith.constant 0 : i32
    return %arg0, %c0_i32 : i32, i32
  }
  func.func @transform_2(%arg0: i32) -> (i32, i32) {
    %c0_i32 = arith.constant 0 : i32
    %c0_i32_0 = arith.constant 0 : i32
    return %arg0, %c0_i32 : i32, i32
  }
}

</mosaic_0001>

<llo_original>
// kernel: tpu_custom_call.1
$region0: #{tpu_custom_call.1}
  #allocation0 [shape = 'u32[]', space=smem, size = 0x4, offset = 0x4, fixed_abs, tag = 'smem constant byte address 0x4 - core index']
  #allocation1 [shape = 'u32[72,128]{1,0:T(1,128)}', space=vmem, size = 0x9000, scoped, tag = 'internal scratch']
  %s0 = inlined_call_operand.hbm [shape: f32[8,256], index: 0, kind: input, shape index: {}]
  %s1 = inlined_call_operand.vmem [shape: f32[8,2], index: 1, kind: input, shape index: {}]
  %s2 = inlined_call_operand.hbm [shape: f32[8,256], index: 2, kind: output, shape index: {}]
  %s3 = sld [smem:[#allocation0]]
  $region22: #{tpu_custom_call.1} parent=0
    _
  %s5 = ssub.s32 1, %s3
  %s6 = scalar_select 0, %s5, %s3
  $region1: #{tpu_custom_call.1} parent=0
    #allocation2 [shape = 'u8[8192]{0}', space=vmem, size = 0x2000, scoped, tag = 'input window, operand 0, single buffered']
    #allocation3 [shape = 's32[1]{0}', space=sflag, size = 0x4, scoped, tag = 'scoped memory for tpu_custom_call.1']
    #allocation4 [shape = 's32[1]{0}', space=sflag, size = 0x4, scoped, tag = 'scoped memory for tpu_custom_call.1']
    #allocation5 [shape = 'u8[8192]{0}', space=vmem, size = 0x2000, scoped, tag = 'output window, operand 0, single buffered']
    %7 = vsyncpa [#allocation3], 0
    %8 = vsyncpa [#allocation4], 0
    // Predicated region
    $region2: #{tpu_custom_call.1} parent=1 // pred_check
      _
    $region3: #{tpu_custom_call.1} parent=1 // pred_check_branch
      %10 = sbr.rel (0) target = $region5
    $region4: #{tpu_custom_call.1} parent=1 // pred_region
      %12 = vsyncadd [#allocation3], 0
      %s14 = sshll.u32 %s0, 4
      %s15 = int_to_ptr.hbm [resolvable:$true] %s14
      %s16 = sshll.u32 [#allocation2], 4
      %s17 = int_to_ptr.vmem [resolvable:$true] %s16
      %19 = dma.hbm_to_vmem [thread:$0]  %s15, 256, %s17, [#allocation3]
    $region5: #{tpu_custom_call.1} parent=1 // pred_fallthru
      _
    // Predicated region
    $region6: #{tpu_custom_call.1} parent=1 // pred_check
      _
    $region7: #{tpu_custom_call.1} parent=1 // pred_check_branch
      %21 = sbr.rel (0) target = $region9
    $region8: #{tpu_custom_call.1} parent=1 // pred_region
      _
    $region9: #{tpu_custom_call.1} parent=1 // pred_fallthru
      _
    // Predicated region
    $region10: #{tpu_custom_call.1} parent=1 // pred_check
      _
    $region11: #{tpu_custom_call.1} parent=1 // pred_check_branch
      %23 = sbr.rel (0) target = $region13
    $region12: #{tpu_custom_call.1} parent=1 // pred_region
      %25 = dma.done [#allocation3], 256
    $region13: #{tpu_custom_call.1} parent=1 // pred_fallthru
      _
    %v26 = vld [vmem:[#allocation2] sm:$0xff]
    %v27 = vld [vmem:[#allocation2 + $0x8] sm:$0xff]
    %v28 = vadd.f32 %v26, %v27
    %29 = vadd.xlane.f32.xlu0 %v28
    %v30 = vpop.xlane.xlu0 %29
    %v31 = vmul.f32 %v26, %v26
    %v32 = vmul.f32 %v27, %v27
    %v33 = vadd.f32 %v31, %v32
    %34 = vadd.xlane.f32.xlu0 %v33
    %v35 = vpop.xlane.xlu0 %34
    %v36 = vmul.f32 %v30, 0.00390625
    %v37 = vmul.f32 %v35, 0.00390625
    %v38 = vmul.f32 %v36, %v36
    %v39 = vsub.f32 %v37, %v38
    %v40 = vmax.f32 %v39, 0.0
    %v41 = vadd.f32 %v40, 1e-05
    %v42 = vrsqrt.pop %v41
    %v43 = vmul.f32 %v42, %v41
    %v44 = vmul.f32 %v43, %v42
    %v45 = vmul.f32 0.5, %v44
    %v46 = vsub.f32 1.5, %v45
    %v47 = vmul.f32 %v42, %v46
    %vm48 = vweird.f32 %v41
    %vm49 = vweird.f32 %v42
    %vm50 = vmor %vm48, %vm49
    %v51 = vsel %vm50, %v42, %v47
    %v52 = vld [vmem:[%s1] sm:$0xff]
    %v53 = vmul.f32 %v52, %v51
    %v54 = vmul.f32 %v36, %v53
    %56 = vrot.lane.b32.xlu0 %v54, 1
    %v57 = vpop.permute.xlu0 %56
    %v59 = vsub.f32 %v52, %v57
    %61 = vset.pattern.permute.xlu0 0
    %62 = vperm.xlu0 %61, %v53
    %v63 = vpop.permute.xlu0 %62
    %v65 = vmul.f32 %v26, %v63
    %v66 = vmul.f32 %v27, %v63
    %68 = vset.pattern.permute.xlu0 1
    %69 = vperm.xlu0 %68, %v59
    %v70 = vpop.permute.xlu0 %69
    %v72 = vadd.f32 %v65, %v70
    %v73 = vadd.f32 %v66, %v70
    %74 = vst [vmem:[#allocation5] sm:$0xff] %v72
    %75 = vst [vmem:[#allocation5 + $0x8] sm:$0xff] %v73
    // Predicated region
    $region14: #{tpu_custom_call.1} parent=1 // pred_check
      _
    $region15: #{tpu_custom_call.1} parent=1 // pred_check_branch
      %77 = sbr.rel (0) target = $region17
    $region16: #{tpu_custom_call.1} parent=1 // pred_region
      %79 = vsyncadd [#allocation4], 0
      %s81 = sshll.u32 [#allocation5], 4
      %s82 = int_to_ptr.vmem [resolvable:$true] %s81
      %s83 = sshll.u32 %s2, 4
      %s84 = int_to_ptr.hbm [resolvable:$true] %s83
      %86 = dma.vmem_to_hbm [thread:$0]  %s82, 256, %s84, [#allocation4]
    $region17: #{tpu_custom_call.1} parent=1 // pred_fallthru
      _
    // Predicated region
    $region18: #{tpu_custom_call.1} parent=1 // pred_check
      _
    $region19: #{tpu_custom_call.1} parent=1 // pred_check_branch
      %88 = sbr.rel (0) target = $region21
    $region20: #{tpu_custom_call.1} parent=1 // pred_region
      %90 = dma.done [#allocation4], 256
    $region21: #{tpu_custom_call.1} parent=1 // pred_fallthru
      _
    %91 = vsyncpa [#allocation3], 1
    %92 = vsyncpa [#allocation4], 1

</llo_original>
